<compile_context>
chip_gen: v7x
topology: tpu7x:2x2x1
jax: 0.10.0
libtpu: 0.0.40
codegen_flags: <defaults>
</compile_context>

<pallas_src>
import jax
import jax.numpy as jnp
from jax.experimental import pallas as pl
from jax.experimental.pallas import tpu as pltpu


HIDDEN_SIZES = (128, 64, 32)


def _round_up(n, m):
    return ((n + m - 1) // m) * m


def mlp_kernel(
    x_ref,
    w1_ref, b1_ref,
    w2_ref, b2_ref,
    w3_ref, b3_ref,
    w4_ref, b4_ref,
    o_ref,
):
    """Fused MLP forward on one (TB, F) batch tile.

    BN affines are pre-folded into (w2, b2), (w3, b3), (w4, b4), so each hidden
    block is just `relu(h @ W + b)`.  The head is computed as w4_row contracted
    against h on the feature axis so the output tile is a lane-dense (1, TB)
    row with the batch on the lane axis.
    """
    h = jnp.dot(x_ref[...], w1_ref[...], preferred_element_type=jnp.float32)
    h = jnp.maximum(h + b1_ref[...], 0.0)

    h = jnp.dot(h.astype(jnp.bfloat16), w2_ref[...],
                preferred_element_type=jnp.float32)
    h = jnp.maximum(h + b2_ref[...], 0.0)

    h = jnp.dot(h.astype(jnp.bfloat16), w3_ref[...],
                preferred_element_type=jnp.float32)
    h = jnp.maximum(h + b3_ref[...], 0.0)

    # Head: (1, 32) contracted with (TB, 32) on the feature axis -> (1, TB).
    out = jax.lax.dot_general(
        w4_ref[...], h.astype(jnp.bfloat16),
        dimension_numbers=(((1,), (1,)), ((), ())),
        preferred_element_type=jnp.float32,
    ) + b4_ref[...]
    o_ref[...] = out.astype(o_ref.dtype)


def taxi_fare_forward(x, folded_params, *, block_b=1024):
    """Calls the fused Pallas kernel; returns shape (B,) like module(x).squeeze()."""
    B, F = x.shape

    # Batch tile: large for throughput, padded to a multiple of 128 so the
    # lane-dense (1, TB) output block satisfies the (8, 128) tiling rule.
    tb = min(block_b, _round_up(max(B, 1), 128))
    grid = pl.cdiv(B, tb)
    b_pad = grid * tb

    x_p = x
    if b_pad != B:
        x_p = jnp.pad(x, ((0, b_pad - B), (0, 0)))
    x_p = x_p.astype(jnp.bfloat16)

    x_spec = pl.BlockSpec((tb, F), lambda i: (i, 0))
    # Weights/biases are tiny (<50 KB total) and stay VMEM-resident across steps.
    param_specs = [pl.BlockSpec(p.shape, lambda i: (0, 0)) for p in folded_params]
    out_spec = pl.BlockSpec((1, tb), lambda i: (0, i))

    h1, h2, h3 = HIDDEN_SIZES
    flops = 2 * b_pad * (F * h1 + h1 * h2 + h2 * h3 + h3 * 1)
    bytes_accessed = (
        b_pad * F * 2                      # bf16 input tile stream
        + b_pad * 4                        # f32 output row
        + sum(int(p.size) * p.dtype.itemsize for p in folded_params)
    )

    out = pl.pallas_call(
        mlp_kernel,
        out_shape=jax.ShapeDtypeStruct((1, b_pad), jnp.float32),
        grid=(grid,),
        in_specs=[x_spec] + param_specs,
        out_specs=out_spec,
        compiler_params=pltpu.CompilerParams(
            dimension_semantics=("parallel",),
        ),
        cost_estimate=pl.CostEstimate(
            flops=int(flops),
            transcendentals=0,
            bytes_accessed=int(bytes_accessed),
        ),
    )(x_p, *folded_params)

    # nn.Sequential output is (B, 1); .squeeze() -> (B,).  The kernel produced a
    # batch-on-lanes (1, b_pad) row; drop the padded tail.
    return out[0, :B]


def init_params(key, input_size, hidden_sizes=HIDDEN_SIZES, eps=1e-5):
    """Deterministic synthetic parameters matching the PyTorch module's shapes.

    Returns a flat tuple:
      (W1, b1, scale1, shift1, W2, b2, scale2, shift2, W3, b3, scale3, shift3, W4, b4)
    where Wk is (in, out) = torch Linear weight transposed and (scale, shift)
    are eval-mode BatchNorm1d folded into a per-feature affine:
        scale = gamma / sqrt(running_var + eps);  shift = beta - running_mean * scale
    """
    params = []
    prev = input_size
    for h in hidden_sizes:
        key, kw, kb, kg, kbt, km, kv = jax.random.split(key, 7)
        bound = 1.0 / jnp.sqrt(prev)
        W = jax.random.uniform(kw, (prev, h), jnp.float32, -bound, bound)
        b = jax.random.uniform(kb, (1, h), jnp.float32, -bound, bound)
        gamma = 1.0 + 0.1 * jax.random.normal(kg, (1, h), jnp.float32)
        beta = 0.1 * jax.random.normal(kbt, (1, h), jnp.float32)
        run_mean = 0.1 * jax.random.normal(km, (1, h), jnp.float32)
        run_var = jnp.abs(1.0 + 0.1 * jax.random.normal(kv, (1, h), jnp.float32))
        scale = gamma / jnp.sqrt(run_var + eps)
        shift = beta - run_mean * scale
        params.extend([W, b, scale, shift])
        prev = h

    key, kw, kb = jax.random.split(key, 3)
    bound = 1.0 / jnp.sqrt(prev)
    W4 = jax.random.uniform(kw, (prev, 1), jnp.float32, -bound, bound)
    b4 = jax.random.uniform(kb, (1, 1), jnp.float32, -bound, bound)
    params.extend([W4, b4])
    return tuple(params)


def fold_params(params):
    """Folds each block's eval-mode BN affine into the following Linear layer.

      (relu(x@W1+b1) * s1 + t1) @ W2 + b2
        == relu(x@W1+b1) @ (s1^T * W2) + (t1 @ W2 + b2)

    Weights are cast to bfloat16 for the native MXU path; biases stay f32.
    The head weight is stored as a (1, 32) row for the lane-dense output dot.
    """
    (W1, b1, s1, t1, W2, b2, s2, t2, W3, b3, s3, t3, W4, b4) = params
    W2f = W2 * s1.reshape(-1, 1)
    b2f = t1 @ W2 + b2
    W3f = W3 * s2.reshape(-1, 1)
    b3f = t2 @ W3 + b3
    W4f = W4 * s3.reshape(-1, 1)            # (32, 1)
    b4f = t3 @ W4 + b4                      # (1, 1)
    W4r = W4f.T                             # (1, 32)
    bf16 = jnp.bfloat16
    return (
        W1.astype(bf16), b1,
        W2f.astype(bf16), b2f,
        W3f.astype(bf16), b3f,
        W4r.astype(bf16), b4f,
    )


def reference_forward_folded(x, folded):
    """Pure-JAX mirror of the kernel numerics (bf16 matmul inputs, f32 accum)."""
    w1, b1, w2, b2, w3, b3, w4r, b4 = folded
    h = jnp.maximum(
        jnp.dot(x.astype(jnp.bfloat16), w1, preferred_element_type=jnp.float32) + b1, 0.0)
    h = jnp.maximum(
        jnp.dot(h.astype(jnp.bfloat16), w2, preferred_element_type=jnp.float32) + b2, 0.0)
    h = jnp.maximum(
        jnp.dot(h.astype(jnp.bfloat16), w3, preferred_element_type=jnp.float32) + b3, 0.0)
    out = jnp.dot(h.astype(jnp.bfloat16), w4r.T,
                  preferred_element_type=jnp.float32) + b4
    return jnp.squeeze(out, axis=-1)


def reference_forward_f32(x, params):
    """Full-precision eval-mode reference of the original module (unfolded)."""
    h = x
    for i in range(3):
        W, b, s, t = params[4 * i: 4 * i + 4]
        h = jnp.maximum(h @ W + b, 0.0) * s + t
    W4, b4 = params[12], params[13]
    return jnp.squeeze(h @ W4 + b4, axis=-1)


if __name__ == "__main__":
    key = jax.random.PRNGKey(0)
    k_params, k_x = jax.random.split(key)

    B = 8            # batch
    INPUT_SIZE = 16  # feature count

    params = init_params(k_params, INPUT_SIZE)
    folded = fold_params(params)
    x = jax.random.normal(k_x, (B, INPUT_SIZE), jnp.float32)

    y = taxi_fare_forward(x, folded)
    y = jax.block_until_ready(y)
    assert y.shape == (B,)

    # Exact-numerics check against a pure-JAX mirror of the kernel's casting.
    y_ref = reference_forward_folded(x, folded)
    assert jnp.allclose(y, y_ref, atol=2e-3, rtol=2e-3), (y, y_ref)

    # Loose sanity check against the full-f32, unfolded eval-mode forward.
    y_f32 = reference_forward_f32(x, params)
    assert jnp.allclose(y, y_f32, atol=1e-1, rtol=1e-1), (y, y_f32)

    print("KERNEL_OK")
</pallas_src>

<mosaic_0001>
module attributes {stable_mosaic.version = 11 : i64} {
  func.func @mlp_kernel(%arg0: i32, %arg1: memref<128x16xbf16, #tpu.memory_space<vmem>>, %arg2: memref<16x128xbf16, #tpu.memory_space<vmem>>, %arg3: memref<1x128xf32, #tpu.memory_space<vmem>>, %arg4: memref<128x64xbf16, #tpu.memory_space<vmem>>, %arg5: memref<1x64xf32, #tpu.memory_space<vmem>>, %arg6: memref<64x32xbf16, #tpu.memory_space<vmem>>, %arg7: memref<1x32xf32, #tpu.memory_space<vmem>>, %arg8: memref<1x32xbf16, #tpu.memory_space<vmem>>, %arg9: memref<1x1xf32, #tpu.memory_space<vmem>>, %arg10: memref<1x128xf32, #tpu.memory_space<vmem>>) attributes {dimension_semantics = [#tpu.dimension_semantics<parallel>], iteration_bounds = array<i64: 1>, scalar_prefetch = 0 : i64, scratch_operands = 0 : i64, tpu.core_type = #tpu.core_type<tc>, window_params = [{transform_indices = @transform_0, window_bounds = array<i64: 128, 16>}, {pipeline_mode = #tpu.pipeline_mode<synchronous>, transform_indices = @transform_1, window_bounds = array<i64: 16, 128>}, {pipeline_mode = #tpu.pipeline_mode<synchronous>, transform_indices = @transform_2, window_bounds = array<i64: 1, 128>}, {pipeline_mode = #tpu.pipeline_mode<synchronous>, transform_indices = @transform_3, window_bounds = array<i64: 128, 64>}, {pipeline_mode = #tpu.pipeline_mode<synchronous>, transform_indices = @transform_4, window_bounds = array<i64: 1, 64>}, {pipeline_mode = #tpu.pipeline_mode<synchronous>, transform_indices = @transform_5, window_bounds = array<i64: 64, 32>}, {pipeline_mode = #tpu.pipeline_mode<synchronous>, transform_indices = @transform_6, window_bounds = array<i64: 1, 32>}, {pipeline_mode = #tpu.pipeline_mode<synchronous>, transform_indices = @transform_7, window_bounds = array<i64: 1, 32>}, {pipeline_mode = #tpu.pipeline_mode<synchronous>, transform_indices = @transform_8, window_bounds = array<i64: 1, 1>}, {transform_indices = @transform_9, window_bounds = array<i64: 1, 128>}]} {
    %c0 = arith.constant 0 : index
    %c0_0 = arith.constant 0 : index
    %0 = vector.load %arg1[%c0, %c0_0] : memref<128x16xbf16, #tpu.memory_space<vmem>>, vector<128x16xbf16>
    %c0_1 = arith.constant 0 : index
    %c0_2 = arith.constant 0 : index
    %1 = vector.load %arg2[%c0_1, %c0_2] : memref<16x128xbf16, #tpu.memory_space<vmem>>, vector<16x128xbf16>
    %cst = arith.constant dense<0.000000e+00> : vector<128x128xf32>
    %2 = tpu.matmul %0, %1, %cst {dimension_numbers = #tpu.dot_dimension_numbers<[1], [0], [0], [1], [0, 0, 1, 1], [], []>} : vector<128x16xbf16>, vector<16x128xbf16>, vector<128x128xf32> -> vector<128x128xf32>
    %c0_3 = arith.constant 0 : index
    %c0_4 = arith.constant 0 : index
    %3 = vector.load %arg3[%c0_3, %c0_4] : memref<1x128xf32, #tpu.memory_space<vmem>>, vector<1x128xf32>
    %4 = vector.broadcast %3 : vector<1x128xf32> to vector<128x128xf32>
    %5 = arith.addf %2, %4 : vector<128x128xf32>
    %cst_5 = arith.constant 0.000000e+00 : f32
    %6 = vector.broadcast %cst_5 : f32 to vector<128x128xf32>
    %7 = arith.maximumf %5, %6 : vector<128x128xf32>
    %8 = arith.truncf %7 : vector<128x128xf32> to vector<128x128xbf16>
    %c0_6 = arith.constant 0 : index
    %c0_7 = arith.constant 0 : index
    %9 = vector.load %arg4[%c0_6, %c0_7] : memref<128x64xbf16, #tpu.memory_space<vmem>>, vector<128x64xbf16>
    %cst_8 = arith.constant dense<0.000000e+00> : vector<128x64xf32>
    %10 = tpu.matmul %8, %9, %cst_8 {dimension_numbers = #tpu.dot_dimension_numbers<[1], [0], [0], [1], [0, 0, 1, 1], [], []>} : vector<128x128xbf16>, vector<128x64xbf16>, vector<128x64xf32> -> vector<128x64xf32>
    %c0_9 = arith.constant 0 : index
    %c0_10 = arith.constant 0 : index
    %11 = vector.load %arg5[%c0_9, %c0_10] : memref<1x64xf32, #tpu.memory_space<vmem>>, vector<1x64xf32>
    %12 = vector.broadcast %11 : vector<1x64xf32> to vector<128x64xf32>
    %13 = arith.addf %10, %12 : vector<128x64xf32>
    %cst_11 = arith.constant 0.000000e+00 : f32
    %14 = vector.broadcast %cst_11 : f32 to vector<128x64xf32>
    %15 = arith.maximumf %13, %14 : vector<128x64xf32>
    %16 = arith.truncf %15 : vector<128x64xf32> to vector<128x64xbf16>
    %c0_12 = arith.constant 0 : index
    %c0_13 = arith.constant 0 : index
    %17 = vector.load %arg6[%c0_12, %c0_13] : memref<64x32xbf16, #tpu.memory_space<vmem>>, vector<64x32xbf16>
    %cst_14 = arith.constant dense<0.000000e+00> : vector<128x32xf32>
    %18 = tpu.matmul %16, %17, %cst_14 {dimension_numbers = #tpu.dot_dimension_numbers<[1], [0], [0], [1], [0, 0, 1, 1], [], []>} : vector<128x64xbf16>, vector<64x32xbf16>, vector<128x32xf32> -> vector<128x32xf32>
    %c0_15 = arith.constant 0 : index
    %c0_16 = arith.constant 0 : index
    %19 = vector.load %arg7[%c0_15, %c0_16] : memref<1x32xf32, #tpu.memory_space<vmem>>, vector<1x32xf32>
    %20 = vector.broadcast %19 : vector<1x32xf32> to vector<128x32xf32>
    %21 = arith.addf %18, %20 : vector<128x32xf32>
    %cst_17 = arith.constant 0.000000e+00 : f32
    %22 = vector.broadcast %cst_17 : f32 to vector<128x32xf32>
    %23 = arith.maximumf %21, %22 : vector<128x32xf32>
    %c0_18 = arith.constant 0 : index
    %c0_19 = arith.constant 0 : index
    %24 = vector.load %arg8[%c0_18, %c0_19] : memref<1x32xbf16, #tpu.memory_space<vmem>>, vector<1x32xbf16>
    %25 = arith.truncf %23 : vector<128x32xf32> to vector<128x32xbf16>
    %cst_20 = arith.constant dense<0.000000e+00> : vector<1x128xf32>
    %26 = tpu.matmul %24, %25, %cst_20 {dimension_numbers = #tpu.dot_dimension_numbers<[1], [1], [0], [0], [0, 0, 1, 0], [], []>} : vector<1x32xbf16>, vector<128x32xbf16>, vector<1x128xf32> -> vector<1x128xf32>
    %c0_21 = arith.constant 0 : index
    %c0_22 = arith.constant 0 : index
    %27 = vector.load %arg9[%c0_21, %c0_22] : memref<1x1xf32, #tpu.memory_space<vmem>>, vector<1x1xf32>
    %28 = vector.broadcast %27 : vector<1x1xf32> to vector<1x128xf32>
    %29 = arith.addf %26, %28 : vector<1x128xf32>
    %c0_23 = arith.constant 0 : index
    %c0_24 = arith.constant 0 : index
    %30 = vector.load %arg10[%c0_23, %c0_24] : memref<1x128xf32, #tpu.memory_space<vmem>>, vector<1x128xf32>
    tpu.vector_store %arg10[%c0_23, %c0_24], %29 {strides = array<i32>} : memref<1x128xf32, #tpu.memory_space<vmem>>, vector<1x128xf32>,
    return
  }
  func.func @transform_0(%arg0: i32) -> (i32, i32) {
    %c0_i32 = arith.constant 0 : i32
    %c0_i32_0 = arith.constant 0 : i32
    return %arg0, %c0_i32 : i32, i32
  }
  func.func @transform_1(%arg0: i32) -> (i32, i32) {
    %c0_i32 = arith.constant 0 : i32
    %c0_i32_0 = arith.constant 0 : i32
    %c0_i32_1 = arith.constant 0 : i32
    return %c0_i32, %c0_i32_0 : i32, i32
  }
  func.func @transform_2(%arg0: i32) -> (i32, i32) {
    %c0_i32 = arith.constant 0 : i32
    %c0_i32_0 = arith.constant 0 : i32
    %c0_i32_1 = arith.constant 0 : i32
    return %c0_i32, %c0_i32_0 : i32, i32
  }
  func.func @transform_3(%arg0: i32) -> (i32, i32) {
    %c0_i32 = arith.constant 0 : i32
    %c0_i32_0 = arith.constant 0 : i32
    %c0_i32_1 = arith.constant 0 : i32
    return %c0_i32, %c0_i32_0 : i32, i32
  }
  func.func @transform_4(%arg0: i32) -> (i32, i32) {
    %c0_i32 = arith.constant 0 : i32
    %c0_i32_0 = arith.constant 0 : i32
    %c0_i32_1 = arith.constant 0 : i32
    return %c0_i32, %c0_i32_0 : i32, i32
  }
  func.func @transform_5(%arg0: i32) -> (i32, i32) {
    %c0_i32 = arith.constant 0 : i32
    %c0_i32_0 = arith.constant 0 : i32
    %c0_i32_1 = arith.constant 0 : i32
    return %c0_i32, %c0_i32_0 : i32, i32
  }
  func.func @transform_6(%arg0: i32) -> (i32, i32) {
    %c0_i32 = arith.constant 0 : i32
    %c0_i32_0 = arith.constant 0 : i32
    %c0_i32_1 = arith.constant 0 : i32
    return %c0_i32, %c0_i32_0 : i32, i32
  }
  func.func @transform_7(%arg0: i32) -> (i32, i32) {
    %c0_i32 = arith.constant 0 : i32
    %c0_i32_0 = arith.constant 0 : i32
    %c0_i32_1 = arith.constant 0 : i32
    return %c0_i32, %c0_i32_0 : i32, i32
  }
  func.func @transform_8(%arg0: i32) -> (i32, i32) {
    %c0_i32 = arith.constant 0 : i32
    %c0_i32_0 = arith.constant 0 : i32
    %c0_i32_1 = arith.constant 0 : i32
    return %c0_i32, %c0_i32_0 : i32, i32
  }
  func.func @transform_9(%arg0: i32) -> (i32, i32) {
    %c0_i32 = arith.constant 0 : i32
    %c0_i32_0 = arith.constant 0 : i32
    return %c0_i32, %arg0 : i32, i32
  }
}

</mosaic_0001>

<llo_original>
// kernel: tpu_custom_call.1
$region0: #{tpu_custom_call.1}
  #allocation0 [shape = 'u32[]', space=smem, size = 0x4, offset = 0x4, fixed_abs, tag = 'smem constant byte address 0x4 - core index']
  #allocation1 [shape = 'u32[144,128]{1,0:T(1,128)}', space=vmem, size = 0x12000, scoped, tag = 'internal scratch']
  #allocation2 [shape = 'f32[1,1]{1,0:T(1,128)S(1)}', space=vmem, size = 0x200, scoped, tag = 'scoped memory for tpu_custom_call.1']
  %s0 = inlined_call_operand.vmem [shape: bf16[128,16], index: 0, kind: input, shape index: {}]
  %s1 = inlined_call_operand.vmem [shape: bf16[16,128], index: 1, kind: input, shape index: {}]
  %s2 = inlined_call_operand.vmem [shape: f32[1,128], index: 2, kind: input, shape index: {}]
  %s3 = inlined_call_operand.vmem [shape: bf16[128,64], index: 3, kind: input, shape index: {}]
  %s4 = inlined_call_operand.vmem [shape: f32[1,64], index: 4, kind: input, shape index: {}]
  %s5 = inlined_call_operand.vmem [shape: bf16[64,32], index: 5, kind: input, shape index: {}]
  %s6 = inlined_call_operand.vmem [shape: f32[1,32], index: 6, kind: input, shape index: {}]
  %s7 = inlined_call_operand.vmem [shape: bf16[1,32], index: 7, kind: input, shape index: {}]
  %s8 = inlined_call_operand.<no memory space> [shape: f32[1,1], index: 8, kind: input, shape index: {}]
  %s9 = inlined_call_operand.hbm [shape: f32[1,128], index: 9, kind: output, shape index: {}]
  %s10 = sld [smem:[#allocation0]]
  $region46: #{tpu_custom_call.1} parent=0
    _
  %s12 = ssub.s32 1, %s10
  %s13 = scalar_select 0, %s12, %s10
  %v14 = vstv %s8
  %15 = vst [vmem:[#allocation2] sm:$0x1] %v14
  $region1: #{tpu_custom_call.1} parent=0
    #allocation3 [shape = 'u8[512]{0}', space=vmem, size = 0x400, scoped, tag = 'output window, operand 0, single buffered']
    #allocation4 [shape = 's32[1]{0}', space=sflag, size = 0x4, scoped, tag = 'scoped memory for tpu_custom_call.1']
    %16 = vsyncpa [#allocation4], 0
    // Predicated region
    $region2: #{tpu_custom_call.1} parent=1 // pred_check
      _
    $region3: #{tpu_custom_call.1} parent=1 // pred_check_branch
      %18 = sbr.rel (0) target = $region5
    $region4: #{tpu_custom_call.1} parent=1 // pred_region
      _
    $region5: #{tpu_custom_call.1} parent=1 // pred_fallthru
      _
    // Predicated region
    $region6: #{tpu_custom_call.1} parent=1 // pred_check
      _
    $region7: #{tpu_custom_call.1} parent=1 // pred_check_branch
      %20 = sbr.rel (0) target = $region9
    $region8: #{tpu_custom_call.1} parent=1 // pred_region
      _
    $region9: #{tpu_custom_call.1} parent=1 // pred_fallthru
      _
    // Predicated region
    $region10: #{tpu_custom_call.1} parent=1 // pred_check
      _
    $region11: #{tpu_custom_call.1} parent=1 // pred_check_branch
      %22 = sbr.rel (0) target = $region13
    $region12: #{tpu_custom_call.1} parent=1 // pred_region
      _
    $region13: #{tpu_custom_call.1} parent=1 // pred_fallthru
      _
    // Predicated region
    $region14: #{tpu_custom_call.1} parent=1 // pred_check
      _
    $region15: #{tpu_custom_call.1} parent=1 // pred_check_branch
      %24 = sbr.rel (0) target = $region17
    $region16: #{tpu_custom_call.1} parent=1 // pred_region
      _
    $region17: #{tpu_custom_call.1} parent=1 // pred_fallthru
      _
    // Predicated region
    $region18: #{tpu_custom_call.1} parent=1 // pred_check
      _
    $region19: #{tpu_custom_call.1} parent=1 // pred_check_branch
      %26 = sbr.rel (0) target = $region21
    $region20: #{tpu_custom_call.1} parent=1 // pred_region
      _
    $region21: #{tpu_custom_call.1} parent=1 // pred_fallthru
      _
    // Predicated region
    $region22: #{tpu_custom_call.1} parent=1 // pred_check
      _
    $region23: #{tpu_custom_call.1} parent=1 // pred_check_branch
      %28 = sbr.rel (0) target = $region25
    $region24: #{tpu_custom_call.1} parent=1 // pred_region
      _
    $region25: #{tpu_custom_call.1} parent=1 // pred_fallthru
      _
    // Predicated region
    $region26: #{tpu_custom_call.1} parent=1 // pred_check
      _
    $region27: #{tpu_custom_call.1} parent=1 // pred_check_branch
      %30 = sbr.rel (0) target = $region29
    $region28: #{tpu_custom_call.1} parent=1 // pred_region
      _
    $region29: #{tpu_custom_call.1} parent=1 // pred_fallthru
      _
    // Predicated region
    $region30: #{tpu_custom_call.1} parent=1 // pred_check
      _
    $region31: #{tpu_custom_call.1} parent=1 // pred_check_branch
      %32 = sbr.rel (0) target = $region33
    $region32: #{tpu_custom_call.1} parent=1 // pred_region
      _
    $region33: #{tpu_custom_call.1} parent=1 // pred_fallthru
      _
    // Predicated region
    $region34: #{tpu_custom_call.1} parent=1 // pred_check
      _
    $region35: #{tpu_custom_call.1} parent=1 // pred_check_branch
      %34 = sbr.rel (0) target = $region37
    $region36: #{tpu_custom_call.1} parent=1 // pred_region
      _
    $region37: #{tpu_custom_call.1} parent=1 // pred_fallthru
      _
    %v36 = vld [vmem:[%s0] sm:$0xf]
    %v37 = vld [vmem:[%s0 + $0x4] sm:$0xf]
    %v38 = vld [vmem:[%s0 + $0x8] sm:$0xf]
    %v39 = vld [vmem:[%s0 + $0xc] sm:$0xf]
    %v40 = vld [vmem:[%s0 + $0x10] sm:$0xf]
    %v41 = vld [vmem:[%s0 + $0x14] sm:$0xf]
    %v42 = vld [vmem:[%s0 + $0x18] sm:$0xf]
    %v43 = vld [vmem:[%s0 + $0x1c] sm:$0xf]
    %v44 = vld [vmem:[%s0 + $0x20] sm:$0xf]
    %v45 = vld [vmem:[%s0 + $0x24] sm:$0xf]
    %v46 = vld [vmem:[%s0 + $0x28] sm:$0xf]
    %v47 = vld [vmem:[%s0 + $0x2c] sm:$0xf]
    %v48 = vld [vmem:[%s0 + $0x30] sm:$0xf]
    %v49 = vld [vmem:[%s0 + $0x34] sm:$0xf]
    %v50 = vld [vmem:[%s0 + $0x38] sm:$0xf]
    %v51 = vld [vmem:[%s0 + $0x3c] sm:$0xf]
    %v52 = vld [vmem:[%s1] sm:$0xf]
    %v53 = vld [vmem:[%s1 + $0x4] sm:$0xf]
    %v54 = vld [vmem:[%s2] sm:$0x1]
    %v56 = vlaneseq
    %v57 = vshrl.u32 %v56, 7
    %v58 = vsub.s32 0, %v57
    %v59 = vrot.slane %v54, %v58
    %v77 = vunpack.c.l.b16 %v36
    %v78 = vunpack.c.l.b16 %v37
    %v79 = vunpack.c.l.b16 %v38
    %v80 = vunpack.c.l.b16 %v39
    %v81 = vunpack.c.l.b16 %v40
    %v82 = vunpack.c.l.b16 %v41
    %v83 = vunpack.c.l.b16 %v42
    %v84 = vunpack.c.l.b16 %v43
    %v85 = vunpack.c.l.b16 %v44
    %v86 = vunpack.c.l.b16 %v45
    %v87 = vunpack.c.l.b16 %v46
    %v88 = vunpack.c.l.b16 %v47
    %v89 = vunpack.c.l.b16 %v48
    %v90 = vunpack.c.l.b16 %v49
    %v91 = vunpack.c.l.b16 %v50
    %v92 = vunpack.c.l.b16 %v51
    %v93 = vpack.c.b16 %v78, %v77
    %v94 = vpack.c.b16 %v80, %v79
    %v95 = vpack.c.b16 %v82, %v81
    %v96 = vpack.c.b16 %v84, %v83
    %v97 = vpack.c.b16 %v86, %v85
    %v98 = vpack.c.b16 %v88, %v87
    %v99 = vpack.c.b16 %v90, %v89
    %v100 = vpack.c.b16 %v92, %v91
    %v103 = vunpack.c.l.b16 %v52
    %v104 = vunpack.c.l.b16 %v53
    %v105 = vpack.c.b16 %v104, %v103
    %vm107 = vcmask 130048
    %v109 = vsel %vm107, %v93, 0
    %v112 = vsel %vm107, %v94, 0
    %v115 = vsel %vm107, %v95, 0
    %v118 = vsel %vm107, %v96, 0
    %v121 = vsel %vm107, %v97, 0
    %v124 = vsel %vm107, %v98, 0
    %v127 = vsel %vm107, %v99, 0
    %v130 = vsel %vm107, %v100, 0
    %132 = vmatprep.subr.bf16.mxu0 0
    %133 = vmatpush1.bf16.msra.mxu0 %v105
    %134 = vmatprep.subr.bf16.mxu0 0
    %135 = vmatpush1.bf16.msra.mxu0 0
    %136 = vmatprep.subr.bf16.mxu0 0
    %137 = vmatpush1.bf16.msra.mxu0 0
    %138 = vmatprep.subr.bf16.mxu0 0
    %139 = vmatpush1.bf16.msra.mxu0 0
    %140 = vmatprep.subr.bf16.mxu0 0
    %141 = vmatpush1.bf16.msra.mxu0 0
    %142 = vmatprep.subr.bf16.mxu0 0
    %143 = vmatpush1.bf16.msra.mxu0 0
    %144 = vmatprep.subr.bf16.mxu0 0
    %145 = vmatpush1.bf16.msra.mxu0 0
    %146 = vmatprep.subr.bf16.mxu0 0
    %147 = vmatpush1.bf16.msra.mxu0 0
    %148 = vmatprep.subr.bf16.mxu0 0
    %149 = vmatpush1.bf16.msra.mxu0 0
    %150 = vmatprep.subr.bf16.mxu0 0
    %151 = vmatpush1.bf16.msra.mxu0 0
    %152 = vmatprep.subr.bf16.mxu0 0
    %153 = vmatpush1.bf16.msra.mxu0 0
    %154 = vmatprep.subr.bf16.mxu0 0
    %155 = vmatpush1.bf16.msra.mxu0 0
    %156 = vmatprep.subr.bf16.mxu0 0
    %157 = vmatpush1.bf16.msra.mxu0 0
    %158 = vmatprep.subr.bf16.mxu0 0
    %159 = vmatpush1.bf16.msra.mxu0 0
    %160 = vmatprep.subr.bf16.mxu0 0
    %161 = vmatpush1.bf16.msra.mxu0 0
    %162 = vmatprep.subr.bf16.mxu0 0
    %163 = vmatpush1.bf16.msra.mxu0 0
    %164 = vmatprep.mubr.bf16.mxu0 0
    %165 = vmatmul.mubr.bf16.gmra.mrb[0].mxu0 %v109
    %v166 = vpop.f32.mrb[0].mxu0
    %v167 = vadd.f32 %v59, %v166
    %v168 = vpop.f32.mrb[0].mxu0
    %v169 = vpop.f32.mrb[0].mxu0
    %v170 = vadd.f32 %v59, %v169
    %v171 = vpop.f32.mrb[0].mxu0
    %172 = vmatprep.mubr.bf16.mxu0 0
    %173 = vmatmul.mubr.bf16.gmra.mrb[0].mxu0 %v112
    %v174 = vpop.f32.mrb[0].mxu0
    %v175 = vadd.f32 %v59, %v174
    %v176 = vpop.f32.mrb[0].mxu0
    %v177 = vpop.f32.mrb[0].mxu0
    %v178 = vadd.f32 %v59, %v177
    %v179 = vpop.f32.mrb[0].mxu0
    %180 = vmatprep.mubr.bf16.mxu0 0
    %181 = vmatmul.mubr.bf16.gmra.mrb[0].mxu0 %v115
    %v182 = vpop.f32.mrb[0].mxu0
    %v183 = vadd.f32 %v59, %v182
    %v184 = vpop.f32.mrb[0].mxu0
    %v185 = vpop.f32.mrb[0].mxu0
    %v186 = vadd.f32 %v59, %v185
    %v187 = vpop.f32.mrb[0].mxu0
    %188 = vmatprep.mubr.bf16.mxu0 0
    %189 = vmatmul.mubr.bf16.gmra.mrb[0].mxu0 %v118
    %v190 = vpop.f32.mrb[0].mxu0
    %v191 = vadd.f32 %v59, %v190
    %v192 = vpop.f32.mrb[0].mxu0
    %v193 = vpop.f32.mrb[0].mxu0
    %v194 = vadd.f32 %v59, %v193
    %v195 = vpop.f32.mrb[0].mxu0
    %196 = vmatprep.mubr.bf16.mxu0 0
    %197 = vmatmul.mubr.bf16.gmra.mrb[0].mxu0 %v121
    %v198 = vpop.f32.mrb[0].mxu0
    %v199 = vadd.f32 %v59, %v198
    %v200 = vpop.f32.mrb[0].mxu0
    %v201 = vpop.f32.mrb[0].mxu0
    %v202 = vadd.f32 %v59, %v201
    %v203 = vpop.f32.mrb[0].mxu0
    %204 = vmatprep.mubr.bf16.mxu0 0
    %205 = vmatmul.mubr.bf16.gmra.mrb[0].mxu0 %v124
    %v206 = vpop.f32.mrb[0].mxu0
    %v207 = vadd.f32 %v59, %v206
    %v208 = vpop.f32.mrb[0].mxu0
    %v209 = vpop.f32.mrb[0].mxu0
    %v210 = vadd.f32 %v59, %v209
    %v211 = vpop.f32.mrb[0].mxu0
    %212 = vmatprep.mubr.bf16.mxu0 0
    %213 = vmatmul.mubr.bf16.gmra.mrb[0].mxu0 %v127
    %v214 = vpop.f32.mrb[0].mxu0
    %v215 = vadd.f32 %v59, %v214
    %v216 = vpop.f32.mrb[0].mxu0
    %v217 = vpop.f32.mrb[0].mxu0
    %v218 = vadd.f32 %v59, %v217
    %v219 = vpop.f32.mrb[0].mxu0
    %220 = vmatprep.mubr.bf16.mxu0 0
    %221 = vmatmul.mubr.bf16.gmra.mrb[0].mxu0 %v130
    %v222 = vpop.f32.mrb[0].mxu0
    %v223 = vadd.f32 %v59, %v222
    %v224 = vpop.f32.mrb[0].mxu0
    %v225 = vpop.f32.mrb[0].mxu0
    %v226 = vadd.f32 %v59, %v225
    %v227 = vpop.f32.mrb[0].mxu0
    %228 = vdwg.mxu0
    %v229 = vmax.f32 %v167, 0.0
    %v230 = vmax.f32 %v170, 0.0
    %v231 = vmax.f32 %v175, 0.0
    %v232 = vmax.f32 %v178, 0.0
    %v233 = vmax.f32 %v183, 0.0
    %v234 = vmax.f32 %v186, 0.0
    %v235 = vmax.f32 %v191, 0.0
    %v236 = vmax.f32 %v194, 0.0
    %v237 = vmax.f32 %v199, 0.0
    %v238 = vmax.f32 %v202, 0.0
    %v239 = vmax.f32 %v207, 0.0
    %v240 = vmax.f32 %v210, 0.0
    %v241 = vmax.f32 %v215, 0.0
    %v242 = vmax.f32 %v218, 0.0
    %v243 = vmax.f32 %v223, 0.0
    %v244 = vmax.f32 %v226, 0.0
    %v245 = vpack.c.bf16 %v230, %v229
    %v246 = vpack.c.bf16 %v232, %v231
    %v247 = vpack.c.bf16 %v234, %v233
    %v248 = vpack.c.bf16 %v236, %v235
    %v249 = vpack.c.bf16 %v238, %v237
    %v250 = vpack.c.bf16 %v240, %v239
    %v251 = vpack.c.bf16 %v242, %v241
    %v252 = vpack.c.bf16 %v244, %v243
    %v253 = vld [vmem:[%s3] sm:$0xf]
    %v254 = vld [vmem:[%s3 + $0x4] sm:$0xf]
    %v255 = vld [vmem:[%s3 + $0x8] sm:$0xf]
    %v256 = vld [vmem:[%s3 + $0xc] sm:$0xf]
    %v257 = vld [vmem:[%s3 + $0x10] sm:$0xf]
    %v258 = vld [vmem:[%s3 + $0x14] sm:$0xf]
    %v259 = vld [vmem:[%s3 + $0x18] sm:$0xf]
    %v260 = vld [vmem:[%s3 + $0x1c] sm:$0xf]
    %v261 = vld [vmem:[%s3 + $0x20] sm:$0xf]
    %v262 = vld [vmem:[%s3 + $0x24] sm:$0xf]
    %v263 = vld [vmem:[%s3 + $0x28] sm:$0xf]
    %v264 = vld [vmem:[%s3 + $0x2c] sm:$0xf]
    %v265 = vld [vmem:[%s3 + $0x30] sm:$0xf]
    %v266 = vld [vmem:[%s3 + $0x34] sm:$0xf]
    %v267 = vld [vmem:[%s3 + $0x38] sm:$0xf]
    %v268 = vld [vmem:[%s3 + $0x3c] sm:$0xf]
    %v269 = vld [vmem:[%s4] sm:$0x1]
    %v271 = vlaneseq
    %v272 = vshrl.u32 %v271, 7
    %v273 = vsub.s32 0, %v272
    %v274 = vrot.slane %v269, %v273
    %v292 = vunpack.c.l.b16 %v253
    %v293 = vunpack.c.l.b16 %v254
    %v294 = vunpack.c.l.b16 %v255
    %v295 = vunpack.c.l.b16 %v256
    %v296 = vunpack.c.l.b16 %v257
    %v297 = vunpack.c.l.b16 %v258
    %v298 = vunpack.c.l.b16 %v259
    %v299 = vunpack.c.l.b16 %v260
    %v300 = vunpack.c.l.b16 %v261
    %v301 = vunpack.c.l.b16 %v262
    %v302 = vunpack.c.l.b16 %v263
    %v303 = vunpack.c.l.b16 %v264
    %v304 = vunpack.c.l.b16 %v265
    %v305 = vunpack.c.l.b16 %v266
    %v306 = vunpack.c.l.b16 %v267
    %v307 = vunpack.c.l.b16 %v268
    %v308 = vpack.c.b16 %v293, %v292
    %v309 = vpack.c.b16 %v295, %v294
    %v310 = vpack.c.b16 %v297, %v296
    %v311 = vpack.c.b16 %v299, %v298
    %v312 = vpack.c.b16 %v301, %v300
    %v313 = vpack.c.b16 %v303, %v302
    %v314 = vpack.c.b16 %v305, %v304
    %v315 = vpack.c.b16 %v307, %v306
    %324 = vmatprep.subr.bf16.mxu0 0
    %325 = vmatpush1.bf16.msra.mxu0 %v308
    %326 = vmatprep.subr.bf16.mxu0 0
    %327 = vmatpush1.bf16.msra.mxu0 %v309
    %328 = vmatprep.subr.bf16.mxu0 0
    %329 = vmatpush1.bf16.msra.mxu0 %v310
    %330 = vmatprep.subr.bf16.mxu0 0
    %331 = vmatpush1.bf16.msra.mxu0 %v311
    %332 = vmatprep.subr.bf16.mxu0 0
    %333 = vmatpush1.bf16.msra.mxu0 %v312
    %334 = vmatprep.subr.bf16.mxu0 0
    %335 = vmatpush1.bf16.msra.mxu0 %v313
    %336 = vmatprep.subr.bf16.mxu0 0
    %337 = vmatpush1.bf16.msra.mxu0 %v314
    %338 = vmatprep.subr.bf16.mxu0 0
    %339 = vmatpush1.bf16.msra.mxu0 %v315
    %340 = vmatprep.subr.bf16.mxu0 0
    %341 = vmatpush1.bf16.msra.mxu0 0
    %342 = vmatprep.subr.bf16.mxu0 0
    %343 = vmatpush1.bf16.msra.mxu0 0
    %344 = vmatprep.subr.bf16.mxu0 0
    %345 = vmatpush1.bf16.msra.mxu0 0
    %346 = vmatprep.subr.bf16.mxu0 0
    %347 = vmatpush1.bf16.msra.mxu0 0
    %348 = vmatprep.subr.bf16.mxu0 0
    %349 = vmatpush1.bf16.msra.mxu0 0
    %350 = vmatprep.subr.bf16.mxu0 0
    %351 = vmatpush1.bf16.msra.mxu0 0
    %352 = vmatprep.subr.bf16.mxu0 0
    %353 = vmatpush1.bf16.msra.mxu0 0
    %354 = vmatprep.subr.bf16.mxu0 0
    %355 = vmatpush1.bf16.msra.mxu0 0
    %356 = vmatprep.mubr.bf16.mxu0 0
    %357 = vmatmul.mubr.bf16.gmra.mrb[0].mxu0 %v245
    %v358 = vpop.f32.mrb[0].mxu0
    %v359 = vadd.f32 %v274, %v358
    %v360 = vpop.f32.mrb[0].mxu0
    %v361 = vpop.f32.mrb[0].mxu0
    %v362 = vadd.f32 %v274, %v361
    %v363 = vpop.f32.mrb[0].mxu0
    %364 = vmatprep.mubr.bf16.mxu0 0
    %365 = vmatmul.mubr.bf16.gmra.mrb[0].mxu0 %v246
    %v366 = vpop.f32.mrb[0].mxu0
    %v367 = vadd.f32 %v274, %v366
    %v368 = vpop.f32.mrb[0].mxu0
    %v369 = vpop.f32.mrb[0].mxu0
    %v370 = vadd.f32 %v274, %v369
    %v371 = vpop.f32.mrb[0].mxu0
    %372 = vmatprep.mubr.bf16.mxu0 0
    %373 = vmatmul.mubr.bf16.gmra.mrb[0].mxu0 %v247
    %v374 = vpop.f32.mrb[0].mxu0
    %v375 = vadd.f32 %v274, %v374
    %v376 = vpop.f32.mrb[0].mxu0
    %v377 = vpop.f32.mrb[0].mxu0
    %v378 = vadd.f32 %v274, %v377
    %v379 = vpop.f32.mrb[0].mxu0
    %380 = vmatprep.mubr.bf16.mxu0 0
    %381 = vmatmul.mubr.bf16.gmra.mrb[0].mxu0 %v248
    %v382 = vpop.f32.mrb[0].mxu0
    %v383 = vadd.f32 %v274, %v382
    %v384 = vpop.f32.mrb[0].mxu0
    %v385 = vpop.f32.mrb[0].mxu0
    %v386 = vadd.f32 %v274, %v385
    %v387 = vpop.f32.mrb[0].mxu0
    %388 = vmatprep.mubr.bf16.mxu0 0
    %389 = vmatmul.mubr.bf16.gmra.mrb[0].mxu0 %v249
    %v390 = vpop.f32.mrb[0].mxu0
    %v391 = vadd.f32 %v274, %v390
    %v392 = vpop.f32.mrb[0].mxu0
    %v393 = vpop.f32.mrb[0].mxu0
    %v394 = vadd.f32 %v274, %v393
    %v395 = vpop.f32.mrb[0].mxu0
    %396 = vmatprep.mubr.bf16.mxu0 0
    %397 = vmatmul.mubr.bf16.gmra.mrb[0].mxu0 %v250
    %v398 = vpop.f32.mrb[0].mxu0
    %v399 = vadd.f32 %v274, %v398
    %v400 = vpop.f32.mrb[0].mxu0
    %v401 = vpop.f32.mrb[0].mxu0
    %v402 = vadd.f32 %v274, %v401
    %v403 = vpop.f32.mrb[0].mxu0
    %404 = vmatprep.mubr.bf16.mxu0 0
    %405 = vmatmul.mubr.bf16.gmra.mrb[0].mxu0 %v251
    %v406 = vpop.f32.mrb[0].mxu0
    %v407 = vadd.f32 %v274, %v406
    %v408 = vpop.f32.mrb[0].mxu0
    %v409 = vpop.f32.mrb[0].mxu0
    %v410 = vadd.f32 %v274, %v409
    %v411 = vpop.f32.mrb[0].mxu0
    %412 = vmatprep.mubr.bf16.mxu0 0
    %413 = vmatmul.mubr.bf16.gmra.mrb[0].mxu0 %v252
    %v414 = vpop.f32.mrb[0].mxu0
    %v415 = vadd.f32 %v274, %v414
    %v416 = vpop.f32.mrb[0].mxu0
    %v417 = vpop.f32.mrb[0].mxu0
    %v418 = vadd.f32 %v274, %v417
    %v419 = vpop.f32.mrb[0].mxu0
    %420 = vdwg.mxu0
    %v421 = vmax.f32 %v359, 0.0
    %v422 = vmax.f32 %v362, 0.0
    %v423 = vmax.f32 %v367, 0.0
    %v424 = vmax.f32 %v370, 0.0
    %v425 = vmax.f32 %v375, 0.0
    %v426 = vmax.f32 %v378, 0.0
    %v427 = vmax.f32 %v383, 0.0
    %v428 = vmax.f32 %v386, 0.0
    %v429 = vmax.f32 %v391, 0.0
    %v430 = vmax.f32 %v394, 0.0
    %v431 = vmax.f32 %v399, 0.0
    %v432 = vmax.f32 %v402, 0.0
    %v433 = vmax.f32 %v407, 0.0
    %v434 = vmax.f32 %v410, 0.0
    %v435 = vmax.f32 %v415, 0.0
    %v436 = vmax.f32 %v418, 0.0
    %v437 = vpack.c.bf16 %v422, %v421
    %v438 = vpack.c.bf16 %v424, %v423
    %v439 = vpack.c.bf16 %v426, %v425
    %v440 = vpack.c.bf16 %v428, %v427
    %v441 = vpack.c.bf16 %v430, %v429
    %v442 = vpack.c.bf16 %v432, %v431
    %v443 = vpack.c.bf16 %v434, %v433
    %v444 = vpack.c.bf16 %v436, %v435
    %v445 = vld [vmem:[%s5] sm:$0xf]
    %v446 = vld [vmem:[%s5 + $0x4] sm:$0xf]
    %v447 = vld [vmem:[%s5 + $0x8] sm:$0xf]
    %v448 = vld [vmem:[%s5 + $0xc] sm:$0xf]
    %v449 = vld [vmem:[%s5 + $0x10] sm:$0xf]
    %v450 = vld [vmem:[%s5 + $0x14] sm:$0xf]
    %v451 = vld [vmem:[%s5 + $0x18] sm:$0xf]
    %v452 = vld [vmem:[%s5 + $0x1c] sm:$0xf]
    %v453 = vld [vmem:[%s6] sm:$0x1]
    %v455 = vlaneseq
    %v456 = vshrl.u32 %v455, 7
    %v457 = vsub.s32 0, %v456
    %v458 = vrot.slane %v453, %v457
    %v468 = vunpack.c.l.b16 %v445
    %v469 = vunpack.c.l.b16 %v446
    %v470 = vunpack.c.l.b16 %v447
    %v471 = vunpack.c.l.b16 %v448
    %v472 = vunpack.c.l.b16 %v449
    %v473 = vunpack.c.l.b16 %v450
    %v474 = vunpack.c.l.b16 %v451
    %v475 = vunpack.c.l.b16 %v452
    %v476 = vpack.c.b16 %v469, %v468
    %v477 = vpack.c.b16 %v471, %v470
    %v478 = vpack.c.b16 %v473, %v472
    %v479 = vpack.c.b16 %v475, %v474
    %vm484 = vcmask 523264
    %v486 = vsel %vm484, %v437, 0
    %v489 = vsel %vm484, %v438, 0
    %v492 = vsel %vm484, %v439, 0
    %v495 = vsel %vm484, %v440, 0
    %v498 = vsel %vm484, %v441, 0
    %v501 = vsel %vm484, %v442, 0
    %v504 = vsel %vm484, %v443, 0
    %v507 = vsel %vm484, %v444, 0
    %509 = vmatprep.subr.bf16.mxu0 0
    %510 = vmatpush1.bf16.msra.mxu0 %v476
    %511 = vmatprep.subr.bf16.mxu0 0
    %512 = vmatpush1.bf16.msra.mxu0 %v477
    %513 = vmatprep.subr.bf16.mxu0 0
    %514 = vmatpush1.bf16.msra.mxu0 %v478
    %515 = vmatprep.subr.bf16.mxu0 0
    %516 = vmatpush1.bf16.msra.mxu0 %v479
    %517 = vmatprep.subr.bf16.mxu0 0
    %518 = vmatpush1.bf16.msra.mxu0 0
    %519 = vmatprep.subr.bf16.mxu0 0
    %520 = vmatpush1.bf16.msra.mxu0 0
    %521 = vmatprep.subr.bf16.mxu0 0
    %522 = vmatpush1.bf16.msra.mxu0 0
    %523 = vmatprep.subr.bf16.mxu0 0
    %524 = vmatpush1.bf16.msra.mxu0 0
    %525 = vmatprep.subr.bf16.mxu0 0
    %526 = vmatpush1.bf16.msra.mxu0 0
    %527 = vmatprep.subr.bf16.mxu0 0
    %528 = vmatpush1.bf16.msra.mxu0 0
    %529 = vmatprep.subr.bf16.mxu0 0
    %530 = vmatpush1.bf16.msra.mxu0 0
    %531 = vmatprep.subr.bf16.mxu0 0
    %532 = vmatpush1.bf16.msra.mxu0 0
    %533 = vmatprep.subr.bf16.mxu0 0
    %534 = vmatpush1.bf16.msra.mxu0 0
    %535 = vmatprep.subr.bf16.mxu0 0
    %536 = vmatpush1.bf16.msra.mxu0 0
    %537 = vmatprep.subr.bf16.mxu0 0
    %538 = vmatpush1.bf16.msra.mxu0 0
    %539 = vmatprep.subr.bf16.mxu0 0
    %540 = vmatpush1.bf16.msra.mxu0 0
    %541 = vmatprep.mubr.bf16.mxu0 0
    %542 = vmatmul.mubr.bf16.gmra.mrb[0].mxu0 %v486
    %v543 = vpop.f32.mrb[0].mxu0
    %v544 = vadd.f32 %v458, %v543
    %v545 = vpop.f32.mrb[0].mxu0
    %v546 = vpop.f32.mrb[0].mxu0
    %v547 = vadd.f32 %v458, %v546
    %v548 = vpop.f32.mrb[0].mxu0
    %549 = vmatprep.mubr.bf16.mxu0 0
    %550 = vmatmul.mubr.bf16.gmra.mrb[0].mxu0 %v489
    %v551 = vpop.f32.mrb[0].mxu0
    %v552 = vadd.f32 %v458, %v551
    %v553 = vpop.f32.mrb[0].mxu0
    %v554 = vpop.f32.mrb[0].mxu0
    %v555 = vadd.f32 %v458, %v554
    %v556 = vpop.f32.mrb[0].mxu0
    %557 = vmatprep.mubr.bf16.mxu0 0
    %558 = vmatmul.mubr.bf16.gmra.mrb[0].mxu0 %v492
    %v559 = vpop.f32.mrb[0].mxu0
    %v560 = vadd.f32 %v458, %v559
    %v561 = vpop.f32.mrb[0].mxu0
    %v562 = vpop.f32.mrb[0].mxu0
    %v563 = vadd.f32 %v458, %v562
    %v564 = vpop.f32.mrb[0].mxu0
    %565 = vmatprep.mubr.bf16.mxu0 0
    %566 = vmatmul.mubr.bf16.gmra.mrb[0].mxu0 %v495
    %v567 = vpop.f32.mrb[0].mxu0
    %v568 = vadd.f32 %v458, %v567
    %v569 = vpop.f32.mrb[0].mxu0
    %v570 = vpop.f32.mrb[0].mxu0
    %v571 = vadd.f32 %v458, %v570
    %v572 = vpop.f32.mrb[0].mxu0
    %573 = vmatprep.mubr.bf16.mxu0 0
    %574 = vmatmul.mubr.bf16.gmra.mrb[0].mxu0 %v498
    %v575 = vpop.f32.mrb[0].mxu0
    %v576 = vadd.f32 %v458, %v575
    %v577 = vpop.f32.mrb[0].mxu0
    %v578 = vpop.f32.mrb[0].mxu0
    %v579 = vadd.f32 %v458, %v578
    %v580 = vpop.f32.mrb[0].mxu0
    %581 = vmatprep.mubr.bf16.mxu0 0
    %582 = vmatmul.mubr.bf16.gmra.mrb[0].mxu0 %v501
    %v583 = vpop.f32.mrb[0].mxu0
    %v584 = vadd.f32 %v458, %v583
    %v585 = vpop.f32.mrb[0].mxu0
    %v586 = vpop.f32.mrb[0].mxu0
    %v587 = vadd.f32 %v458, %v586
    %v588 = vpop.f32.mrb[0].mxu0
    %589 = vmatprep.mubr.bf16.mxu0 0
    %590 = vmatmul.mubr.bf16.gmra.mrb[0].mxu0 %v504
    %v591 = vpop.f32.mrb[0].mxu0
    %v592 = vadd.f32 %v458, %v591
    %v593 = vpop.f32.mrb[0].mxu0
    %v594 = vpop.f32.mrb[0].mxu0
    %v595 = vadd.f32 %v458, %v594
    %v596 = vpop.f32.mrb[0].mxu0
    %597 = vmatprep.mubr.bf16.mxu0 0
    %598 = vmatmul.mubr.bf16.gmra.mrb[0].mxu0 %v507
    %v599 = vpop.f32.mrb[0].mxu0
    %v600 = vadd.f32 %v458, %v599
    %v601 = vpop.f32.mrb[0].mxu0
    %v602 = vpop.f32.mrb[0].mxu0
    %v603 = vadd.f32 %v458, %v602
    %v604 = vpop.f32.mrb[0].mxu0
    %605 = vdwg.mxu0
    %v606 = vmax.f32 %v544, 0.0
    %v607 = vmax.f32 %v547, 0.0
    %v608 = vmax.f32 %v552, 0.0
    %v609 = vmax.f32 %v555, 0.0
    %v610 = vmax.f32 %v560, 0.0
    %v611 = vmax.f32 %v563, 0.0
    %v612 = vmax.f32 %v568, 0.0
    %v613 = vmax.f32 %v571, 0.0
    %v614 = vmax.f32 %v576, 0.0
    %v615 = vmax.f32 %v579, 0.0
    %v616 = vmax.f32 %v584, 0.0
    %v617 = vmax.f32 %v587, 0.0
    %v618 = vmax.f32 %v592, 0.0
    %v619 = vmax.f32 %v595, 0.0
    %v620 = vmax.f32 %v600, 0.0
    %v621 = vmax.f32 %v603, 0.0
    %v622 = vld [vmem:[%s7] sm:$0x1]
    %v623 = vpack.c.bf16 %v607, %v606
    %v624 = vpack.c.bf16 %v609, %v608
    %v625 = vpack.c.bf16 %v611, %v610
    %v626 = vpack.c.bf16 %v613, %v612
    %v627 = vpack.c.bf16 %v615, %v614
    %v628 = vpack.c.bf16 %v617, %v616
    %v629 = vpack.c.bf16 %v619, %v618
    %v630 = vpack.c.bf16 %v621, %v620
    %v631 = vld [vmem:[#allocation2] sm:$0x1]
    %633 = vset.pattern.permute.xlu0 0
    %634 = vperm.xlu0 %633, %v631
    %v635 = vpop.permute.xlu0 %634
    %v637 = vlaneseq
    %v638 = vshrl.u32 %v637, 7
    %v639 = vsub.s32 0, %v638
    %v640 = vrot.slane %v635, %v639
    %vm641 = vcmask 261120
    %v643 = vsel %vm641, %v622, 0
    %v646 = vsel %vm641, %v623, 0
    %v649 = vsel %vm641, %v624, 0
    %v652 = vsel %vm641, %v625, 0
    %v655 = vsel %vm641, %v626, 0
    %v658 = vsel %vm641, %v627, 0
    %v661 = vsel %vm641, %v628, 0
    %v664 = vsel %vm641, %v629, 0
    %v667 = vsel %vm641, %v630, 0
    %669 = vmatprep.subr.bf16.mxu0 0
    %670 = vmatpush1.bf16.xpose.msra.mxu0 %v646
    %671 = vmatprep.subr.bf16.mxu0 0
    %672 = vmatpush1.bf16.xpose.msra.mxu0 %v649
    %673 = vmatprep.subr.bf16.mxu0 0
    %674 = vmatpush1.bf16.xpose.msra.mxu0 %v652
    %675 = vmatprep.subr.bf16.mxu0 0
    %676 = vmatpush1.bf16.xpose.msra.mxu0 %v655
    %677 = vmatprep.subr.bf16.mxu0 0
    %678 = vmatpush1.bf16.xpose.msra.mxu0 %v658
    %679 = vmatprep.subr.bf16.mxu0 0
    %680 = vmatpush1.bf16.xpose.msra.mxu0 %v661
    %681 = vmatprep.subr.bf16.mxu0 0
    %682 = vmatpush1.bf16.xpose.msra.mxu0 %v664
    %683 = vmatprep.subr.bf16.mxu0 0
    %684 = vmatpush1.bf16.xpose.msra.mxu0 %v667
    %685 = vmatprep.subr.bf16.mxu0 0
    %686 = vmatpush1.bf16.xpose.msra.mxu0 0
    %687 = vmatprep.subr.bf16.mxu0 0
    %688 = vmatpush1.bf16.xpose.msra.mxu0 0
    %689 = vmatprep.subr.bf16.mxu0 0
    %690 = vmatpush1.bf16.xpose.msra.mxu0 0
    %691 = vmatprep.subr.bf16.mxu0 0
    %692 = vmatpush1.bf16.xpose.msra.mxu0 0
    %693 = vmatprep.subr.bf16.mxu0 0
    %694 = vmatpush1.bf16.xpose.msra.mxu0 0
    %695 = vmatprep.subr.bf16.mxu0 0
    %696 = vmatpush1.bf16.xpose.msra.mxu0 0
    %697 = vmatprep.subr.bf16.mxu0 0
    %698 = vmatpush1.bf16.xpose.msra.mxu0 0
    %699 = vmatprep.subr.bf16.mxu0 0
    %700 = vmatpush1.bf16.xpose.msra.mxu0 0
    %701 = vmatprep.mubr.bf16.mxu0 0
    %702 = vmatmul.mubr.bf16.gmra.mrb[0].mxu0 %v643
    %v703 = vpop.f32.mrb[0].mxu0
    %v704 = vadd.f32 %v640, %v703
    %v705 = vpop.f32.mrb[0].mxu0
    %v706 = vpop.f32.mrb[0].mxu0
    %v707 = vpop.f32.mrb[0].mxu0
    %708 = vdwg.mxu0
    %709 = vst [vmem:[#allocation3] sm:$0x1] %v704
    // Predicated region
    $region38: #{tpu_custom_call.1} parent=1 // pred_check
      _
    $region39: #{tpu_custom_call.1} parent=1 // pred_check_branch
      %711 = sbr.rel (0) target = $region41
    $region40: #{tpu_custom_call.1} parent=1 // pred_region
      %s713 = ssub.s32 16, 16
      %714 = vsyncadd [#allocation4], %s713
      %s716 = sshll.u32 [#allocation3], 4
      %s717 = int_to_ptr.vmem [resolvable:$true] %s716
      %719 = dma.vmem_to_hbm [thread:$0]  %s717, 16, %s9, [#allocation4]
    $region41: #{tpu_custom_call.1} parent=1 // pred_fallthru
      _
    // Predicated region
    $region42: #{tpu_custom_call.1} parent=1 // pred_check
      _
    $region43: #{tpu_custom_call.1} parent=1 // pred_check_branch
      %721 = sbr.rel (0) target = $region45
    $region44: #{tpu_custom_call.1} parent=1 // pred_region
      %722 = dma.done [#allocation4], 16
    $region45: #{tpu_custom_call.1} parent=1 // pred_fallthru
      _
    %723 = vsyncpa [#allocation4], 1

</llo_original>
